<compile_context>
chip_gen: v7x
topology: tpu7x:2x2x1
jax: 0.10.0
libtpu: 0.0.40
codegen_flags: <defaults>
</compile_context>

<pallas_src>
import jax
import jax.numpy as jnp
from jax.experimental import pallas as pl
from jax.experimental.pallas import tpu as pltpu


def _round_up(x, m):
    return (x + m - 1) // m * m


def _pick_batch_tile(B, L, E, resident_bytes, out_row_bytes,
                     vmem_budget=32 * 1024 * 1024):
    """Largest Bt in {256..8} whose double-buffered per-step blocks fit ~3/4 of
    the budget (sized against v7x's 32 MiB scoped default), without padding a
    tiny batch up to a huge tile; keeps >=2 grid steps for v7x megacore when
    the batch is large enough."""
    b_pad8 = max(8, _round_up(B, 8))
    for bt in (256, 128, 64, 32, 16, 8):
        if bt > b_pad8:
            continue
        per_step = 2 * bt * (L * E * 2 + out_row_bytes) + 2 * resident_bytes
        if per_step > (3 * vmem_budget) // 4:
            continue
        if bt > 8 and _round_up(B, bt) // bt < 2:
            bt //= 2  # split so both v7x TensorCores get a tile
        return bt
    return 8


# ----------------------------- fused kernel ---------------------------------

def make_fused_cnn_kernel(kernel_sizes, L, E, C, n_fc, Bt):
    """Ref order: emb2d (Bt*L,E bf16), w_stack (E,sumK*C bf16),
    conv_bias_cat (1,nK*C f32), fc_w*n_fc (bf16), fc_b*n_fc (f32), out (f32)."""

    def kernel(emb_ref, wstack_ref, cbias_ref, *refs):
        fc_w = refs[0:n_fc]
        fc_b = refs[n_fc:2 * n_fc]
        out_ref = refs[-1]

        # --- all conv taps & branches in ONE 2-D MXU matmul ------------------
        # (Bt*L, E) @ (E, sum_i K_i*C) with f32 accumulation.
        y = jnp.dot(emb_ref[...], wstack_ref[...],
                    preferred_element_type=jnp.float32)
        n_stack = y.shape[-1]
        y = y.reshape(Bt, L, n_stack)            # split sublane groups; L%8==0

        # --- per-branch shifted adds + max over time --------------------------
        pooled = []
        col = 0
        for K in kernel_sizes:
            T = L - K + 1
            acc = y[:, 0:T, col:col + C]          # tap 0 seeds the accumulator
            for k in range(1, K):
                acc = acc + y[:, k:k + T, col + k * C:col + (k + 1) * C]
            pooled.append(jnp.max(acc, axis=1))   # (Bt, C)
            col += K * C

        # Deferred bias + ReLU (valid: bias const over T, ReLU monotone),
        # applied once on the concatenated (Bt, nK*C) pooled vector.
        h = jnp.maximum(jnp.concatenate(pooled, axis=1) + cbias_ref[...], 0.0)

        # --- FC chain: bf16 operands, f32 accumulation -----------------------
        for j in range(n_fc):
            z = jnp.dot(h.astype(jnp.bfloat16), fc_w[j][...],
                        preferred_element_type=jnp.float32)
            h = jnp.maximum(z + fc_b[j][...], 0.0)

        out_ref[...] = h                          # (Bt, Hpad) lane-dense f32

    return kernel


# ------------------------------ wrapper --------------------------------------

def cnn_forward(params, data, kernel_sizes, hidden_size):
    """data: (B, L) int32 token ids.  Returns (B, hidden_size) float32."""
    B, L = data.shape
    E = params["emb"].shape[1]
    C = params["convs"][0][0].shape[1]
    nK = len(kernel_sizes)

    # bf16 embedding gather (no f32 round-trip through HBM)
    emb_bf16 = params["emb"].astype(jnp.bfloat16)
    embeds = jnp.take(emb_bf16, data, axis=0)                 # (B, L, E) bf16

    # Pack every conv tap of every branch into one (E, sum_i K_i*C) matrix.
    tap_cols = []
    for (w, _), K in zip(params["convs"], kernel_sizes):
        for k in range(K):
            tap_cols.append(w[k * E:(k + 1) * E, :])          # (E, C)
    w_stack = jnp.concatenate(tap_cols, axis=1).astype(jnp.bfloat16)
    conv_b_cat = jnp.concatenate([b for (_, b) in params["convs"]], axis=1)

    # FC weights in bf16, biases in f32; pad last layer to lane-dense 128 cols.
    fc_ws = [w.astype(jnp.bfloat16) for (w, _) in params["fc"]]
    fc_bs = [b for (_, b) in params["fc"]]
    H = fc_ws[-1].shape[1]
    Hpad = _round_up(H, 128)
    if Hpad != H:
        fc_ws[-1] = jnp.pad(fc_ws[-1], ((0, 0), (0, Hpad - H)))
        fc_bs[-1] = jnp.pad(fc_bs[-1], ((0, 0), (0, Hpad - H)))
    n_fc = len(fc_ws)

    # VMEM budgeting: grid-invariant inputs are double-buffered by default.
    resident_bytes = (w_stack.size * 2 + conv_b_cat.size * 4
                      + sum(w.size * 2 for w in fc_ws)
                      + sum(b.size * 4 for b in fc_bs))
    Bt = _pick_batch_tile(B, L, E, resident_bytes, out_row_bytes=Hpad * 4)
    B_pad = _round_up(B, Bt)
    if B_pad != B:
        embeds = jnp.pad(embeds, ((0, B_pad - B), (0, 0), (0, 0)))
    emb2d = embeds.reshape(B_pad * L, E)                      # explicit 2-D LHS

    per_step_bytes = 2 * Bt * (L * E * 2 + Hpad * 4) + 2 * resident_bytes
    vmem_limit = min(64 * 1024 * 1024, max(32 * 1024 * 1024, 2 * per_step_bytes))

    kernel = make_fused_cnn_kernel(tuple(kernel_sizes), L, E, C, n_fc, Bt)

    in_specs = [pl.BlockSpec((Bt * L, E), lambda i: (i, 0)),
                pl.BlockSpec(w_stack.shape, lambda i: (0, 0)),
                pl.BlockSpec(conv_b_cat.shape, lambda i: (0, 0))]
    for w in fc_ws:
        in_specs.append(pl.BlockSpec(w.shape, lambda i: (0, 0)))
    for b in fc_bs:
        in_specs.append(pl.BlockSpec(b.shape, lambda i: (0, 0)))

    out = pl.pallas_call(
        kernel,
        out_shape=jax.ShapeDtypeStruct((B_pad, Hpad), jnp.float32),
        grid=(B_pad // Bt,),
        in_specs=in_specs,
        out_specs=pl.BlockSpec((Bt, Hpad), lambda i: (i, 0)),
        compiler_params=pltpu.CompilerParams(
            dimension_semantics=("parallel",),
            vmem_limit_bytes=int(vmem_limit)),
    )(emb2d, w_stack, conv_b_cat, *fc_ws, *fc_bs)

    return out[:B, :hidden_size]


# --------------------------- params & reference ------------------------------

def init_params(key, vocab_size, emb_size, kernel_num, kernel_sizes,
                hidden_size, num_layers):
    assert num_layers > 0, "Invalid layer numbers"
    keys = jax.random.split(key, 1 + 2 * len(kernel_sizes) + 2 * num_layers)
    ki = iter(range(len(keys)))
    params = {}
    params["emb"] = 0.1 * jax.random.normal(
        keys[next(ki)], (vocab_size, emb_size), jnp.float32)
    # Conv2d(1, C, (K, E)) weight (C,1,K,E) stored flattened+transposed (K*E, C)
    params["convs"] = []
    for K in kernel_sizes:
        w = 0.1 * jax.random.normal(keys[next(ki)],
                                    (K * emb_size, kernel_num), jnp.float32)
        b = 0.1 * jax.random.normal(keys[next(ki)], (1, kernel_num),
                                    jnp.float32)
        params["convs"].append((w, b))
    # Linear weights stored transposed as (in, out)
    params["fc"] = []
    in_dim = len(kernel_sizes) * kernel_num
    for _ in range(num_layers):
        w = 0.1 * jax.random.normal(keys[next(ki)], (in_dim, hidden_size),
                                    jnp.float32)
        b = 0.1 * jax.random.normal(keys[next(ki)], (1, hidden_size),
                                    jnp.float32)
        params["fc"].append((w, b))
        in_dim = hidden_size
    return params


def cnn_reference(params, data, kernel_sizes):
    """Pure-JAX f32 reference with original (conv -> ReLU -> maxpool) order."""
    embeds = jnp.take(params["emb"], data, axis=0)
    B, L, E = embeds.shape
    pooled = []
    for K, (w, b) in zip(kernel_sizes, params["convs"]):
        T = L - K + 1
        unf = jnp.concatenate([embeds[:, k:k + T, :] for k in range(K)],
                              axis=-1)                        # (B, T, K*E)
        s = jnp.einsum("btk,kc->btc", unf, w) + b[None, :, :]
        pooled.append(jnp.max(jnp.maximum(s, 0.0), axis=1))
    x = jnp.concatenate(pooled, axis=1)
    for (w, b) in params["fc"]:
        x = jnp.maximum(jnp.dot(x, w) + b, 0.0)
    return x


# --------------------------------- main --------------------------------------

if __name__ == "__main__":
    vocab_size = 50
    emb_size = 32
    seq_len = 16
    batch = 2
    kernel_num = 8
    kernel_sizes = (3, 4, 5)
    hidden_size = 32
    num_layers = 2

    key = jax.random.PRNGKey(0)
    pkey, dkey = jax.random.split(key)
    params = init_params(pkey, vocab_size, emb_size, kernel_num,
                         kernel_sizes, hidden_size, num_layers)
    data = jax.random.randint(dkey, (batch, seq_len), 0, vocab_size,
                              dtype=jnp.int32)

    out = cnn_forward(params, data, kernel_sizes, hidden_size)
    jax.block_until_ready(out)
    assert out.shape == (batch, hidden_size)
    assert out.dtype == jnp.float32

    ref = cnn_reference(params, data, kernel_sizes)
    assert bool(jnp.allclose(out, ref, rtol=5e-2, atol=5e-2)), (
        "mismatch vs pure-JAX reference")

    print("KERNEL_OK")
</pallas_src>

<mosaic_0001>
module attributes {stable_mosaic.version = 11 : i64} {
  func.func @kernel(%arg0: i32, %arg1: memref<128x32xbf16, #tpu.memory_space<vmem>>, %arg2: memref<32x96xbf16, #tpu.memory_space<vmem>>, %arg3: memref<1x24xf32, #tpu.memory_space<vmem>>, %arg4: memref<24x32xbf16, #tpu.memory_space<vmem>>, %arg5: memref<32x128xbf16, #tpu.memory_space<vmem>>, %arg6: memref<1x32xf32, #tpu.memory_space<vmem>>, %arg7: memref<1x128xf32, #tpu.memory_space<vmem>>, %arg8: memref<8x128xf32, #tpu.memory_space<vmem>>) attributes {dimension_semantics = [#tpu.dimension_semantics<parallel>], iteration_bounds = array<i64: 1>, scalar_prefetch = 0 : i64, scratch_operands = 0 : i64, tpu.core_type = #tpu.core_type<tc>, window_params = [{transform_indices = @transform_0, window_bounds = array<i64: 128, 32>}, {pipeline_mode = #tpu.pipeline_mode<synchronous>, transform_indices = @transform_1, window_bounds = array<i64: 32, 96>}, {pipeline_mode = #tpu.pipeline_mode<synchronous>, transform_indices = @transform_2, window_bounds = array<i64: 1, 24>}, {pipeline_mode = #tpu.pipeline_mode<synchronous>, transform_indices = @transform_3, window_bounds = array<i64: 24, 32>}, {pipeline_mode = #tpu.pipeline_mode<synchronous>, transform_indices = @transform_4, window_bounds = array<i64: 32, 128>}, {pipeline_mode = #tpu.pipeline_mode<synchronous>, transform_indices = @transform_5, window_bounds = array<i64: 1, 32>}, {pipeline_mode = #tpu.pipeline_mode<synchronous>, transform_indices = @transform_6, window_bounds = array<i64: 1, 128>}, {transform_indices = @transform_7, window_bounds = array<i64: 8, 128>}]} {
    %c0 = arith.constant 0 : index
    %c0_0 = arith.constant 0 : index
    %0 = vector.load %arg1[%c0, %c0_0] : memref<128x32xbf16, #tpu.memory_space<vmem>>, vector<128x32xbf16>
    %c0_1 = arith.constant 0 : index
    %c0_2 = arith.constant 0 : index
    %1 = vector.load %arg2[%c0_1, %c0_2] : memref<32x96xbf16, #tpu.memory_space<vmem>>, vector<32x96xbf16>
    %cst = arith.constant dense<0.000000e+00> : vector<128x96xf32>
    %2 = tpu.matmul %0, %1, %cst {dimension_numbers = #tpu.dot_dimension_numbers<[1], [0], [0], [1], [0, 0, 1, 1], [], []>} : vector<128x32xbf16>, vector<32x96xbf16>, vector<128x96xf32> -> vector<128x96xf32>
    %3 = vector.shape_cast %2 : vector<128x96xf32> to vector<8x16x96xf32>
    %4 = vector.extract_strided_slice %3 {offsets = [0, 0, 0], sizes = [8, 14, 8], strides = [1, 1, 1]} : vector<8x16x96xf32> to vector<8x14x8xf32>
    %5 = vector.extract_strided_slice %3 {offsets = [0, 1, 8], sizes = [8, 14, 8], strides = [1, 1, 1]} : vector<8x16x96xf32> to vector<8x14x8xf32>
    %6 = arith.addf %4, %5 : vector<8x14x8xf32>
    %7 = vector.extract_strided_slice %3 {offsets = [0, 2, 16], sizes = [8, 14, 8], strides = [1, 1, 1]} : vector<8x16x96xf32> to vector<8x14x8xf32>
    %8 = arith.addf %6, %7 : vector<8x14x8xf32>
    %cst_3 = arith.constant dense<0xFF800000> : vector<8x8xf32>
    %9 = vector.multi_reduction <maximumf>, %8, %cst_3 [1] : vector<8x14x8xf32> to vector<8x8xf32>
    %10 = vector.extract_strided_slice %3 {offsets = [0, 0, 24], sizes = [8, 13, 8], strides = [1, 1, 1]} : vector<8x16x96xf32> to vector<8x13x8xf32>
    %11 = vector.extract_strided_slice %3 {offsets = [0, 1, 32], sizes = [8, 13, 8], strides = [1, 1, 1]} : vector<8x16x96xf32> to vector<8x13x8xf32>
    %12 = arith.addf %10, %11 : vector<8x13x8xf32>
    %13 = vector.extract_strided_slice %3 {offsets = [0, 2, 40], sizes = [8, 13, 8], strides = [1, 1, 1]} : vector<8x16x96xf32> to vector<8x13x8xf32>
    %14 = arith.addf %12, %13 : vector<8x13x8xf32>
    %15 = vector.extract_strided_slice %3 {offsets = [0, 3, 48], sizes = [8, 13, 8], strides = [1, 1, 1]} : vector<8x16x96xf32> to vector<8x13x8xf32>
    %16 = arith.addf %14, %15 : vector<8x13x8xf32>
    %cst_4 = arith.constant dense<0xFF800000> : vector<8x8xf32>
    %17 = vector.multi_reduction <maximumf>, %16, %cst_4 [1] : vector<8x13x8xf32> to vector<8x8xf32>
    %18 = vector.extract_strided_slice %3 {offsets = [0, 0, 56], sizes = [8, 12, 8], strides = [1, 1, 1]} : vector<8x16x96xf32> to vector<8x12x8xf32>
    %19 = vector.extract_strided_slice %3 {offsets = [0, 1, 64], sizes = [8, 12, 8], strides = [1, 1, 1]} : vector<8x16x96xf32> to vector<8x12x8xf32>
    %20 = arith.addf %18, %19 : vector<8x12x8xf32>
    %21 = vector.extract_strided_slice %3 {offsets = [0, 2, 72], sizes = [8, 12, 8], strides = [1, 1, 1]} : vector<8x16x96xf32> to vector<8x12x8xf32>
    %22 = arith.addf %20, %21 : vector<8x12x8xf32>
    %23 = vector.extract_strided_slice %3 {offsets = [0, 3, 80], sizes = [8, 12, 8], strides = [1, 1, 1]} : vector<8x16x96xf32> to vector<8x12x8xf32>
    %24 = arith.addf %22, %23 : vector<8x12x8xf32>
    %25 = vector.extract_strided_slice %3 {offsets = [0, 4, 88], sizes = [8, 12, 8], strides = [1, 1, 1]} : vector<8x16x96xf32> to vector<8x12x8xf32>
    %26 = arith.addf %24, %25 : vector<8x12x8xf32>
    %cst_5 = arith.constant dense<0xFF800000> : vector<8x8xf32>
    %27 = vector.multi_reduction <maximumf>, %26, %cst_5 [1] : vector<8x12x8xf32> to vector<8x8xf32>
    %28 = tpu.concatenate %9, %17, %27 in 1 : vector<8x8xf32>, vector<8x8xf32>, vector<8x8xf32> -> vector<8x24xf32>
    %c0_6 = arith.constant 0 : index
    %c0_7 = arith.constant 0 : index
    %29 = vector.load %arg3[%c0_6, %c0_7] : memref<1x24xf32, #tpu.memory_space<vmem>>, vector<1x24xf32>
    %30 = vector.broadcast %29 : vector<1x24xf32> to vector<8x24xf32>
    %31 = arith.addf %28, %30 : vector<8x24xf32>
    %cst_8 = arith.constant 0.000000e+00 : f32
    %32 = vector.broadcast %cst_8 : f32 to vector<8x24xf32>
    %33 = arith.maximumf %31, %32 : vector<8x24xf32>
    %34 = arith.truncf %33 : vector<8x24xf32> to vector<8x24xbf16>
    %c0_9 = arith.constant 0 : index
    %c0_10 = arith.constant 0 : index
    %35 = vector.load %arg4[%c0_9, %c0_10] : memref<24x32xbf16, #tpu.memory_space<vmem>>, vector<24x32xbf16>
    %cst_11 = arith.constant dense<0.000000e+00> : vector<8x32xf32>
    %36 = tpu.matmul %34, %35, %cst_11 {dimension_numbers = #tpu.dot_dimension_numbers<[1], [0], [0], [1], [0, 0, 1, 1], [], []>} : vector<8x24xbf16>, vector<24x32xbf16>, vector<8x32xf32> -> vector<8x32xf32>
    %c0_12 = arith.constant 0 : index
    %c0_13 = arith.constant 0 : index
    %37 = vector.load %arg6[%c0_12, %c0_13] : memref<1x32xf32, #tpu.memory_space<vmem>>, vector<1x32xf32>
    %38 = vector.broadcast %37 : vector<1x32xf32> to vector<8x32xf32>
    %39 = arith.addf %36, %38 : vector<8x32xf32>
    %cst_14 = arith.constant 0.000000e+00 : f32
    %40 = vector.broadcast %cst_14 : f32 to vector<8x32xf32>
    %41 = arith.maximumf %39, %40 : vector<8x32xf32>
    %42 = arith.truncf %41 : vector<8x32xf32> to vector<8x32xbf16>
    %c0_15 = arith.constant 0 : index
    %c0_16 = arith.constant 0 : index
    %43 = vector.load %arg5[%c0_15, %c0_16] : memref<32x128xbf16, #tpu.memory_space<vmem>>, vector<32x128xbf16>
    %cst_17 = arith.constant dense<0.000000e+00> : vector<8x128xf32>
    %44 = tpu.matmul %42, %43, %cst_17 {dimension_numbers = #tpu.dot_dimension_numbers<[1], [0], [0], [1], [0, 0, 1, 1], [], []>} : vector<8x32xbf16>, vector<32x128xbf16>, vector<8x128xf32> -> vector<8x128xf32>
    %c0_18 = arith.constant 0 : index
    %c0_19 = arith.constant 0 : index
    %45 = vector.load %arg7[%c0_18, %c0_19] : memref<1x128xf32, #tpu.memory_space<vmem>>, vector<1x128xf32>
    %46 = vector.broadcast %45 : vector<1x128xf32> to vector<8x128xf32>
    %47 = arith.addf %44, %46 : vector<8x128xf32>
    %cst_20 = arith.constant 0.000000e+00 : f32
    %48 = vector.broadcast %cst_20 : f32 to vector<8x128xf32>
    %49 = arith.maximumf %47, %48 : vector<8x128xf32>
    %c0_21 = arith.constant 0 : index
    %c0_22 = arith.constant 0 : index
    %50 = vector.load %arg8[%c0_21, %c0_22] : memref<8x128xf32, #tpu.memory_space<vmem>>, vector<8x128xf32>
    tpu.vector_store %arg8[%c0_21, %c0_22], %49 {strides = array<i32>} : memref<8x128xf32, #tpu.memory_space<vmem>>, vector<8x128xf32>,
    return
  }
  func.func @transform_0(%arg0: i32) -> (i32, i32) {
    %c0_i32 = arith.constant 0 : i32
    %c0_i32_0 = arith.constant 0 : i32
    return %arg0, %c0_i32 : i32, i32
  }
  func.func @transform_1(%arg0: i32) -> (i32, i32) {
    %c0_i32 = arith.constant 0 : i32
    %c0_i32_0 = arith.constant 0 : i32
    %c0_i32_1 = arith.constant 0 : i32
    return %c0_i32, %c0_i32_0 : i32, i32
  }
  func.func @transform_2(%arg0: i32) -> (i32, i32) {
    %c0_i32 = arith.constant 0 : i32
    %c0_i32_0 = arith.constant 0 : i32
    %c0_i32_1 = arith.constant 0 : i32
    return %c0_i32, %c0_i32_0 : i32, i32
  }
  func.func @transform_3(%arg0: i32) -> (i32, i32) {
    %c0_i32 = arith.constant 0 : i32
    %c0_i32_0 = arith.constant 0 : i32
    %c0_i32_1 = arith.constant 0 : i32
    return %c0_i32, %c0_i32_0 : i32, i32
  }
  func.func @transform_4(%arg0: i32) -> (i32, i32) {
    %c0_i32 = arith.constant 0 : i32
    %c0_i32_0 = arith.constant 0 : i32
    %c0_i32_1 = arith.constant 0 : i32
    return %c0_i32, %c0_i32_0 : i32, i32
  }
  func.func @transform_5(%arg0: i32) -> (i32, i32) {
    %c0_i32 = arith.constant 0 : i32
    %c0_i32_0 = arith.constant 0 : i32
    %c0_i32_1 = arith.constant 0 : i32
    return %c0_i32, %c0_i32_0 : i32, i32
  }
  func.func @transform_6(%arg0: i32) -> (i32, i32) {
    %c0_i32 = arith.constant 0 : i32
    %c0_i32_0 = arith.constant 0 : i32
    %c0_i32_1 = arith.constant 0 : i32
    return %c0_i32, %c0_i32_0 : i32, i32
  }
  func.func @transform_7(%arg0: i32) -> (i32, i32) {
    %c0_i32 = arith.constant 0 : i32
    %c0_i32_0 = arith.constant 0 : i32
    return %arg0, %c0_i32 : i32, i32
  }
}

</mosaic_0001>

<llo_original>
// kernel: tpu_custom_call.1
$region0: #{tpu_custom_call.1}
  #allocation0 [shape = 'u32[]', space=smem, size = 0x4, offset = 0x4, fixed_abs, tag = 'smem constant byte address 0x4 - core index']
  #allocation1 [shape = 'u32[144,128]{1,0:T(1,128)}', space=vmem, size = 0x12000, scoped, tag = 'internal scratch']
  %s0 = inlined_call_operand.vmem [shape: bf16[128,32], index: 0, kind: input, shape index: {}]
  %s1 = inlined_call_operand.vmem [shape: bf16[32,96], index: 1, kind: input, shape index: {}]
  %s2 = inlined_call_operand.vmem [shape: f32[1,24], index: 2, kind: input, shape index: {}]
  %s3 = inlined_call_operand.vmem [shape: bf16[24,32], index: 3, kind: input, shape index: {}]
  %s4 = inlined_call_operand.vmem [shape: bf16[32,128], index: 4, kind: input, shape index: {}]
  %s5 = inlined_call_operand.vmem [shape: f32[1,32], index: 5, kind: input, shape index: {}]
  %s6 = inlined_call_operand.vmem [shape: f32[1,128], index: 6, kind: input, shape index: {}]
  %s7 = inlined_call_operand.hbm [shape: f32[8,128], index: 7, kind: output, shape index: {}]
  %s8 = sld [smem:[#allocation0]]
  $region38: #{tpu_custom_call.1} parent=0
    _
  %s10 = ssub.s32 1, %s8
  %s11 = scalar_select 0, %s10, %s8
  $region1: #{tpu_custom_call.1} parent=0
    #allocation2 [shape = 'u8[4096]{0}', space=vmem, size = 0x1000, scoped, tag = 'output window, operand 0, single buffered']
    #allocation3 [shape = 's32[1]{0}', space=sflag, size = 0x4, scoped, tag = 'scoped memory for tpu_custom_call.1']
    %12 = vsyncpa [#allocation3], 0
    // Predicated region
    $region2: #{tpu_custom_call.1} parent=1 // pred_check
      _
    $region3: #{tpu_custom_call.1} parent=1 // pred_check_branch
      %14 = sbr.rel (0) target = $region5
    $region4: #{tpu_custom_call.1} parent=1 // pred_region
      _
    $region5: #{tpu_custom_call.1} parent=1 // pred_fallthru
      _
    // Predicated region
    $region6: #{tpu_custom_call.1} parent=1 // pred_check
      _
    $region7: #{tpu_custom_call.1} parent=1 // pred_check_branch
      %16 = sbr.rel (0) target = $region9
    $region8: #{tpu_custom_call.1} parent=1 // pred_region
      _
    $region9: #{tpu_custom_call.1} parent=1 // pred_fallthru
      _
    // Predicated region
    $region10: #{tpu_custom_call.1} parent=1 // pred_check
      _
    $region11: #{tpu_custom_call.1} parent=1 // pred_check_branch
      %18 = sbr.rel (0) target = $region13
    $region12: #{tpu_custom_call.1} parent=1 // pred_region
      _
    $region13: #{tpu_custom_call.1} parent=1 // pred_fallthru
      _
    // Predicated region
    $region14: #{tpu_custom_call.1} parent=1 // pred_check
      _
    $region15: #{tpu_custom_call.1} parent=1 // pred_check_branch
      %20 = sbr.rel (0) target = $region17
    $region16: #{tpu_custom_call.1} parent=1 // pred_region
      _
    $region17: #{tpu_custom_call.1} parent=1 // pred_fallthru
      _
    // Predicated region
    $region18: #{tpu_custom_call.1} parent=1 // pred_check
      _
    $region19: #{tpu_custom_call.1} parent=1 // pred_check_branch
      %22 = sbr.rel (0) target = $region21
    $region20: #{tpu_custom_call.1} parent=1 // pred_region
      _
    $region21: #{tpu_custom_call.1} parent=1 // pred_fallthru
      _
    // Predicated region
    $region22: #{tpu_custom_call.1} parent=1 // pred_check
      _
    $region23: #{tpu_custom_call.1} parent=1 // pred_check_branch
      %24 = sbr.rel (0) target = $region25
    $region24: #{tpu_custom_call.1} parent=1 // pred_region
      _
    $region25: #{tpu_custom_call.1} parent=1 // pred_fallthru
      _
    // Predicated region
    $region26: #{tpu_custom_call.1} parent=1 // pred_check
      _
    $region27: #{tpu_custom_call.1} parent=1 // pred_check_branch
      %26 = sbr.rel (0) target = $region29
    $region28: #{tpu_custom_call.1} parent=1 // pred_region
      _
    $region29: #{tpu_custom_call.1} parent=1 // pred_fallthru
      _
    %v28 = vld [vmem:[%s0] sm:$0xf]
    %v29 = vld [vmem:[%s0 + $0x4] sm:$0xf]
    %v30 = vld [vmem:[%s0 + $0x8] sm:$0xf]
    %v31 = vld [vmem:[%s0 + $0xc] sm:$0xf]
    %v32 = vld [vmem:[%s0 + $0x10] sm:$0xf]
    %v33 = vld [vmem:[%s0 + $0x14] sm:$0xf]
    %v34 = vld [vmem:[%s0 + $0x18] sm:$0xf]
    %v35 = vld [vmem:[%s0 + $0x1c] sm:$0xf]
    %v36 = vld [vmem:[%s0 + $0x20] sm:$0xf]
    %v37 = vld [vmem:[%s0 + $0x24] sm:$0xf]
    %v38 = vld [vmem:[%s0 + $0x28] sm:$0xf]
    %v39 = vld [vmem:[%s0 + $0x2c] sm:$0xf]
    %v40 = vld [vmem:[%s0 + $0x30] sm:$0xf]
    %v41 = vld [vmem:[%s0 + $0x34] sm:$0xf]
    %v42 = vld [vmem:[%s0 + $0x38] sm:$0xf]
    %v43 = vld [vmem:[%s0 + $0x3c] sm:$0xf]
    %v44 = vld [vmem:[%s1] sm:$0xf]
    %v45 = vld [vmem:[%s1 + $0x4] sm:$0xf]
    %v46 = vld [vmem:[%s1 + $0x8] sm:$0xf]
    %v47 = vld [vmem:[%s1 + $0xc] sm:$0xf]
    %v64 = vunpack.c.l.b16 %v28
    %v65 = vunpack.c.l.b16 %v29
    %v66 = vunpack.c.l.b16 %v30
    %v67 = vunpack.c.l.b16 %v31
    %v68 = vunpack.c.l.b16 %v32
    %v69 = vunpack.c.l.b16 %v33
    %v70 = vunpack.c.l.b16 %v34
    %v71 = vunpack.c.l.b16 %v35
    %v72 = vunpack.c.l.b16 %v36
    %v73 = vunpack.c.l.b16 %v37
    %v74 = vunpack.c.l.b16 %v38
    %v75 = vunpack.c.l.b16 %v39
    %v76 = vunpack.c.l.b16 %v40
    %v77 = vunpack.c.l.b16 %v41
    %v78 = vunpack.c.l.b16 %v42
    %v79 = vunpack.c.l.b16 %v43
    %v80 = vpack.c.b16 %v65, %v64
    %v81 = vpack.c.b16 %v67, %v66
    %v82 = vpack.c.b16 %v69, %v68
    %v83 = vpack.c.b16 %v71, %v70
    %v84 = vpack.c.b16 %v73, %v72
    %v85 = vpack.c.b16 %v75, %v74
    %v86 = vpack.c.b16 %v77, %v76
    %v87 = vpack.c.b16 %v79, %v78
    %v92 = vunpack.c.l.b16 %v44
    %v93 = vunpack.c.l.b16 %v45
    %v94 = vunpack.c.l.b16 %v46
    %v95 = vunpack.c.l.b16 %v47
    %v96 = vpack.c.b16 %v93, %v92
    %v97 = vpack.c.b16 %v95, %v94
    %vm100 = vcmask 261120
    %v102 = vsel %vm100, %v80, 0
    %v105 = vsel %vm100, %v81, 0
    %v108 = vsel %vm100, %v82, 0
    %v111 = vsel %vm100, %v83, 0
    %v114 = vsel %vm100, %v84, 0
    %v117 = vsel %vm100, %v85, 0
    %v120 = vsel %vm100, %v86, 0
    %v123 = vsel %vm100, %v87, 0
    %125 = vmatprep.subr.bf16.mxu0 0
    %126 = vmatpush1.bf16.msra.mxu0 %v96
    %127 = vmatprep.subr.bf16.mxu0 0
    %128 = vmatpush1.bf16.msra.mxu0 %v97
    %129 = vmatprep.subr.bf16.mxu0 0
    %130 = vmatpush1.bf16.msra.mxu0 0
    %131 = vmatprep.subr.bf16.mxu0 0
    %132 = vmatpush1.bf16.msra.mxu0 0
    %133 = vmatprep.subr.bf16.mxu0 0
    %134 = vmatpush1.bf16.msra.mxu0 0
    %135 = vmatprep.subr.bf16.mxu0 0
    %136 = vmatpush1.bf16.msra.mxu0 0
    %137 = vmatprep.subr.bf16.mxu0 0
    %138 = vmatpush1.bf16.msra.mxu0 0
    %139 = vmatprep.subr.bf16.mxu0 0
    %140 = vmatpush1.bf16.msra.mxu0 0
    %141 = vmatprep.subr.bf16.mxu0 0
    %142 = vmatpush1.bf16.msra.mxu0 0
    %143 = vmatprep.subr.bf16.mxu0 0
    %144 = vmatpush1.bf16.msra.mxu0 0
    %145 = vmatprep.subr.bf16.mxu0 0
    %146 = vmatpush1.bf16.msra.mxu0 0
    %147 = vmatprep.subr.bf16.mxu0 0
    %148 = vmatpush1.bf16.msra.mxu0 0
    %149 = vmatprep.subr.bf16.mxu0 0
    %150 = vmatpush1.bf16.msra.mxu0 0
    %151 = vmatprep.subr.bf16.mxu0 0
    %152 = vmatpush1.bf16.msra.mxu0 0
    %153 = vmatprep.subr.bf16.mxu0 0
    %154 = vmatpush1.bf16.msra.mxu0 0
    %155 = vmatprep.subr.bf16.mxu0 0
    %156 = vmatpush1.bf16.msra.mxu0 0
    %157 = vmatprep.mubr.bf16.mxu0 0
    %158 = vmatmul.mubr.bf16.gmra.mrb[0].mxu0 %v102
    %v159 = vpop.f32.mrb[0].mxu0
    %v160 = vadd.f32 0.0, %v159
    %v161 = vpop.f32.mrb[0].mxu0
    %v162 = vpop.f32.mrb[0].mxu0
    %v163 = vadd.f32 0.0, %v162
    %v164 = vpop.f32.mrb[0].mxu0
    %165 = vmatprep.mubr.bf16.mxu0 0
    %166 = vmatmul.mubr.bf16.gmra.mrb[0].mxu0 %v105
    %v167 = vpop.f32.mrb[0].mxu0
    %v168 = vadd.f32 0.0, %v167
    %v169 = vpop.f32.mrb[0].mxu0
    %v170 = vpop.f32.mrb[0].mxu0
    %v171 = vadd.f32 0.0, %v170
    %v172 = vpop.f32.mrb[0].mxu0
    %173 = vmatprep.mubr.bf16.mxu0 0
    %174 = vmatmul.mubr.bf16.gmra.mrb[0].mxu0 %v108
    %v175 = vpop.f32.mrb[0].mxu0
    %v176 = vadd.f32 0.0, %v175
    %v177 = vpop.f32.mrb[0].mxu0
    %v178 = vpop.f32.mrb[0].mxu0
    %v179 = vadd.f32 0.0, %v178
    %v180 = vpop.f32.mrb[0].mxu0
    %181 = vmatprep.mubr.bf16.mxu0 0
    %182 = vmatmul.mubr.bf16.gmra.mrb[0].mxu0 %v111
    %v183 = vpop.f32.mrb[0].mxu0
    %v184 = vadd.f32 0.0, %v183
    %v185 = vpop.f32.mrb[0].mxu0
    %v186 = vpop.f32.mrb[0].mxu0
    %v187 = vadd.f32 0.0, %v186
    %v188 = vpop.f32.mrb[0].mxu0
    %189 = vmatprep.mubr.bf16.mxu0 0
    %190 = vmatmul.mubr.bf16.gmra.mrb[0].mxu0 %v114
    %v191 = vpop.f32.mrb[0].mxu0
    %v192 = vadd.f32 0.0, %v191
    %v193 = vpop.f32.mrb[0].mxu0
    %v194 = vpop.f32.mrb[0].mxu0
    %v195 = vadd.f32 0.0, %v194
    %v196 = vpop.f32.mrb[0].mxu0
    %197 = vmatprep.mubr.bf16.mxu0 0
    %198 = vmatmul.mubr.bf16.gmra.mrb[0].mxu0 %v117
    %v199 = vpop.f32.mrb[0].mxu0
    %v200 = vadd.f32 0.0, %v199
    %v201 = vpop.f32.mrb[0].mxu0
    %v202 = vpop.f32.mrb[0].mxu0
    %v203 = vadd.f32 0.0, %v202
    %v204 = vpop.f32.mrb[0].mxu0
    %205 = vmatprep.mubr.bf16.mxu0 0
    %206 = vmatmul.mubr.bf16.gmra.mrb[0].mxu0 %v120
    %v207 = vpop.f32.mrb[0].mxu0
    %v208 = vadd.f32 0.0, %v207
    %v209 = vpop.f32.mrb[0].mxu0
    %v210 = vpop.f32.mrb[0].mxu0
    %v211 = vadd.f32 0.0, %v210
    %v212 = vpop.f32.mrb[0].mxu0
    %213 = vmatprep.mubr.bf16.mxu0 0
    %214 = vmatmul.mubr.bf16.gmra.mrb[0].mxu0 %v123
    %v215 = vpop.f32.mrb[0].mxu0
    %v216 = vadd.f32 0.0, %v215
    %v217 = vpop.f32.mrb[0].mxu0
    %v218 = vpop.f32.mrb[0].mxu0
    %v219 = vadd.f32 0.0, %v218
    %v220 = vpop.f32.mrb[0].mxu0
    %221 = vdwg.mxu0
    %vm238 = vcmask 1046528
    %v239 = vrot.slane %v160, 1
    %v240 = vrot.slane %v163, 1
    %v241 = vsel %vm238, %v239, %v240
    %v242 = vrot.slane %v168, 1
    %v243 = vrot.slane %v171, 1
    %v244 = vsel %vm238, %v242, %v243
    %v245 = vrot.slane %v176, 1
    %v246 = vrot.slane %v179, 1
    %v247 = vsel %vm238, %v245, %v246
    %v248 = vrot.slane %v184, 1
    %v249 = vrot.slane %v187, 1
    %v250 = vsel %vm238, %v248, %v249
    %v251 = vrot.slane %v192, 1
    %v252 = vrot.slane %v195, 1
    %v253 = vsel %vm238, %v251, %v252
    %v254 = vrot.slane %v200, 1
    %v255 = vrot.slane %v203, 1
    %v256 = vsel %vm238, %v254, %v255
    %v257 = vrot.slane %v208, 1
    %v258 = vrot.slane %v211, 1
    %v259 = vsel %vm238, %v257, %v258
    %v260 = vrot.slane %v216, 1
    %v261 = vrot.slane %v219, 1
    %v262 = vsel %vm238, %v260, %v261
    %263 = vrot.lane.b32.xlu0 %v241, 120
    %v264 = vpop.permute.xlu0 %263
    %265 = vrot.lane.b32.xlu0 %v240, 120
    %v266 = vpop.permute.xlu0 %265
    %267 = vrot.lane.b32.xlu0 %v244, 120
    %v268 = vpop.permute.xlu0 %267
    %269 = vrot.lane.b32.xlu0 %v243, 120
    %v270 = vpop.permute.xlu0 %269
    %271 = vrot.lane.b32.xlu0 %v247, 120
    %v272 = vpop.permute.xlu0 %271
    %273 = vrot.lane.b32.xlu0 %v246, 120
    %v274 = vpop.permute.xlu0 %273
    %275 = vrot.lane.b32.xlu0 %v250, 120
    %v276 = vpop.permute.xlu0 %275
    %277 = vrot.lane.b32.xlu0 %v249, 120
    %v278 = vpop.permute.xlu0 %277
    %279 = vrot.lane.b32.xlu0 %v253, 120
    %v280 = vpop.permute.xlu0 %279
    %281 = vrot.lane.b32.xlu0 %v252, 120
    %v282 = vpop.permute.xlu0 %281
    %283 = vrot.lane.b32.xlu0 %v256, 120
    %v284 = vpop.permute.xlu0 %283
    %285 = vrot.lane.b32.xlu0 %v255, 120
    %v286 = vpop.permute.xlu0 %285
    %287 = vrot.lane.b32.xlu0 %v259, 120
    %v288 = vpop.permute.xlu0 %287
    %289 = vrot.lane.b32.xlu0 %v258, 120
    %v290 = vpop.permute.xlu0 %289
    %291 = vrot.lane.b32.xlu0 %v262, 120
    %v292 = vpop.permute.xlu0 %291
    %293 = vrot.lane.b32.xlu0 %v261, 120
    %v294 = vpop.permute.xlu0 %293
    %v311 = vadd.f32 %v160, %v264
    %v312 = vadd.f32 %v163, %v266
    %v313 = vadd.f32 %v168, %v268
    %v314 = vadd.f32 %v171, %v270
    %v315 = vadd.f32 %v176, %v272
    %v316 = vadd.f32 %v179, %v274
    %v317 = vadd.f32 %v184, %v276
    %v318 = vadd.f32 %v187, %v278
    %v319 = vadd.f32 %v192, %v280
    %v320 = vadd.f32 %v195, %v282
    %v321 = vadd.f32 %v200, %v284
    %v322 = vadd.f32 %v203, %v286
    %v323 = vadd.f32 %v208, %v288
    %v324 = vadd.f32 %v211, %v290
    %v325 = vadd.f32 %v216, %v292
    %v326 = vadd.f32 %v219, %v294
    %vm327 = vcmask 1045504
    %v328 = vrot.slane %v160, 2
    %v329 = vrot.slane %v163, 2
    %v330 = vsel %vm327, %v328, %v329
    %v331 = vrot.slane %v168, 2
    %v332 = vrot.slane %v171, 2
    %v333 = vsel %vm327, %v331, %v332
    %v334 = vrot.slane %v176, 2
    %v335 = vrot.slane %v179, 2
    %v336 = vsel %vm327, %v334, %v335
    %v337 = vrot.slane %v184, 2
    %v338 = vrot.slane %v187, 2
    %v339 = vsel %vm327, %v337, %v338
    %v340 = vrot.slane %v192, 2
    %v341 = vrot.slane %v195, 2
    %v342 = vsel %vm327, %v340, %v341
    %v343 = vrot.slane %v200, 2
    %v344 = vrot.slane %v203, 2
    %v345 = vsel %vm327, %v343, %v344
    %v346 = vrot.slane %v208, 2
    %v347 = vrot.slane %v211, 2
    %v348 = vsel %vm327, %v346, %v347
    %v349 = vrot.slane %v216, 2
    %v350 = vrot.slane %v219, 2
    %v351 = vsel %vm327, %v349, %v350
    %352 = vrot.lane.b32.xlu0 %v330, 112
    %v353 = vpop.permute.xlu0 %352
    %354 = vrot.lane.b32.xlu0 %v329, 112
    %v355 = vpop.permute.xlu0 %354
    %356 = vrot.lane.b32.xlu0 %v333, 112
    %v357 = vpop.permute.xlu0 %356
    %358 = vrot.lane.b32.xlu0 %v332, 112
    %v359 = vpop.permute.xlu0 %358
    %360 = vrot.lane.b32.xlu0 %v336, 112
    %v361 = vpop.permute.xlu0 %360
    %362 = vrot.lane.b32.xlu0 %v335, 112
    %v363 = vpop.permute.xlu0 %362
    %364 = vrot.lane.b32.xlu0 %v339, 112
    %v365 = vpop.permute.xlu0 %364
    %366 = vrot.lane.b32.xlu0 %v338, 112
    %v367 = vpop.permute.xlu0 %366
    %368 = vrot.lane.b32.xlu0 %v342, 112
    %v369 = vpop.permute.xlu0 %368
    %370 = vrot.lane.b32.xlu0 %v341, 112
    %v371 = vpop.permute.xlu0 %370
    %372 = vrot.lane.b32.xlu0 %v345, 112
    %v373 = vpop.permute.xlu0 %372
    %374 = vrot.lane.b32.xlu0 %v344, 112
    %v375 = vpop.permute.xlu0 %374
    %376 = vrot.lane.b32.xlu0 %v348, 112
    %v377 = vpop.permute.xlu0 %376
    %378 = vrot.lane.b32.xlu0 %v347, 112
    %v379 = vpop.permute.xlu0 %378
    %380 = vrot.lane.b32.xlu0 %v351, 112
    %v381 = vpop.permute.xlu0 %380
    %382 = vrot.lane.b32.xlu0 %v350, 112
    %v383 = vpop.permute.xlu0 %382
    %v400 = vadd.f32 %v311, %v353
    %v401 = vadd.f32 %v312, %v355
    %v402 = vadd.f32 %v313, %v357
    %v403 = vadd.f32 %v314, %v359
    %v404 = vadd.f32 %v315, %v361
    %v405 = vadd.f32 %v316, %v363
    %v406 = vadd.f32 %v317, %v365
    %v407 = vadd.f32 %v318, %v367
    %v408 = vadd.f32 %v319, %v369
    %v409 = vadd.f32 %v320, %v371
    %v410 = vadd.f32 %v321, %v373
    %v411 = vadd.f32 %v322, %v375
    %v412 = vadd.f32 %v323, %v377
    %v413 = vadd.f32 %v324, %v379
    %v414 = vadd.f32 %v325, %v381
    %v415 = vadd.f32 %v326, %v383
    %vm416 = vcmask 64512
    %v417 = vsel %vm416, %v400, -inf
    %vm418 = vcmask 62464
    %v419 = vsel %vm418, %v401, -inf
    %v420 = vmax.f32 %v417, %v419
    %v421 = vrot.slane %v420, 4
    %v422 = vmax.f32 %v420, %v421
    %v423 = vrot.slane %v422, 2
    %v424 = vmax.f32 %v422, %v423
    %v425 = vrot.slane %v424, 1
    %v426 = vmax.f32 %v424, %v425
    %v427 = vsel %vm416, %v402, -inf
    %v428 = vsel %vm418, %v403, -inf
    %v429 = vmax.f32 %v427, %v428
    %v430 = vrot.slane %v429, 4
    %v431 = vmax.f32 %v429, %v430
    %v432 = vrot.slane %v431, 2
    %v433 = vmax.f32 %v431, %v432
    %v434 = vrot.slane %v433, 1
    %v435 = vmax.f32 %v433, %v434
    %v436 = vsel %vm416, %v404, -inf
    %v437 = vsel %vm418, %v405, -inf
    %v438 = vmax.f32 %v436, %v437
    %v439 = vrot.slane %v438, 4
    %v440 = vmax.f32 %v438, %v439
    %v441 = vrot.slane %v440, 2
    %v442 = vmax.f32 %v440, %v441
    %v443 = vrot.slane %v442, 1
    %v444 = vmax.f32 %v442, %v443
    %v445 = vsel %vm416, %v406, -inf
    %v446 = vsel %vm418, %v407, -inf
    %v447 = vmax.f32 %v445, %v446
    %v448 = vrot.slane %v447, 4
    %v449 = vmax.f32 %v447, %v448
    %v450 = vrot.slane %v449, 2
    %v451 = vmax.f32 %v449, %v450
    %v452 = vrot.slane %v451, 1
    %v453 = vmax.f32 %v451, %v452
    %v454 = vsel %vm416, %v408, -inf
    %v455 = vsel %vm418, %v409, -inf
    %v456 = vmax.f32 %v454, %v455
    %v457 = vrot.slane %v456, 4
    %v458 = vmax.f32 %v456, %v457
    %v459 = vrot.slane %v458, 2
    %v460 = vmax.f32 %v458, %v459
    %v461 = vrot.slane %v460, 1
    %v462 = vmax.f32 %v460, %v461
    %v463 = vsel %vm416, %v410, -inf
    %v464 = vsel %vm418, %v411, -inf
    %v465 = vmax.f32 %v463, %v464
    %v466 = vrot.slane %v465, 4
    %v467 = vmax.f32 %v465, %v466
    %v468 = vrot.slane %v467, 2
    %v469 = vmax.f32 %v467, %v468
    %v470 = vrot.slane %v469, 1
    %v471 = vmax.f32 %v469, %v470
    %v472 = vsel %vm416, %v412, -inf
    %v473 = vsel %vm418, %v413, -inf
    %v474 = vmax.f32 %v472, %v473
    %v475 = vrot.slane %v474, 4
    %v476 = vmax.f32 %v474, %v475
    %v477 = vrot.slane %v476, 2
    %v478 = vmax.f32 %v476, %v477
    %v479 = vrot.slane %v478, 1
    %v480 = vmax.f32 %v478, %v479
    %v481 = vsel %vm416, %v414, -inf
    %v482 = vsel %vm418, %v415, -inf
    %v483 = vmax.f32 %v481, %v482
    %v484 = vrot.slane %v483, 4
    %v485 = vmax.f32 %v483, %v484
    %v486 = vrot.slane %v485, 2
    %v487 = vmax.f32 %v485, %v486
    %v488 = vrot.slane %v487, 1
    %v489 = vmax.f32 %v487, %v488
    %vm490 = vcmask 1044480
    %v491 = vrot.slane %v160, 3
    %v492 = vrot.slane %v163, 3
    %v493 = vsel %vm490, %v491, %v492
    %v494 = vrot.slane %v168, 3
    %v495 = vrot.slane %v171, 3
    %v496 = vsel %vm490, %v494, %v495
    %v497 = vrot.slane %v176, 3
    %v498 = vrot.slane %v179, 3
    %v499 = vsel %vm490, %v497, %v498
    %v500 = vrot.slane %v184, 3
    %v501 = vrot.slane %v187, 3
    %v502 = vsel %vm490, %v500, %v501
    %v503 = vrot.slane %v192, 3
    %v504 = vrot.slane %v195, 3
    %v505 = vsel %vm490, %v503, %v504
    %v506 = vrot.slane %v200, 3
    %v507 = vrot.slane %v203, 3
    %v508 = vsel %vm490, %v506, %v507
    %v509 = vrot.slane %v208, 3
    %v510 = vrot.slane %v211, 3
    %v511 = vsel %vm490, %v509, %v510
    %v512 = vrot.slane %v216, 3
    %v513 = vrot.slane %v219, 3
    %v514 = vsel %vm490, %v512, %v513
    %515 = vrot.lane.b32.xlu0 %v493, 104
    %v516 = vpop.permute.xlu0 %515
    %517 = vrot.lane.b32.xlu0 %v492, 104
    %v518 = vpop.permute.xlu0 %517
    %519 = vrot.lane.b32.xlu0 %v496, 104
    %v520 = vpop.permute.xlu0 %519
    %521 = vrot.lane.b32.xlu0 %v495, 104
    %v522 = vpop.permute.xlu0 %521
    %523 = vrot.lane.b32.xlu0 %v499, 104
    %v524 = vpop.permute.xlu0 %523
    %525 = vrot.lane.b32.xlu0 %v498, 104
    %v526 = vpop.permute.xlu0 %525
    %527 = vrot.lane.b32.xlu0 %v502, 104
    %v528 = vpop.permute.xlu0 %527
    %529 = vrot.lane.b32.xlu0 %v501, 104
    %v530 = vpop.permute.xlu0 %529
    %531 = vrot.lane.b32.xlu0 %v505, 104
    %v532 = vpop.permute.xlu0 %531
    %533 = vrot.lane.b32.xlu0 %v504, 104
    %v534 = vpop.permute.xlu0 %533
    %535 = vrot.lane.b32.xlu0 %v508, 104
    %v536 = vpop.permute.xlu0 %535
    %537 = vrot.lane.b32.xlu0 %v507, 104
    %v538 = vpop.permute.xlu0 %537
    %539 = vrot.lane.b32.xlu0 %v511, 104
    %v540 = vpop.permute.xlu0 %539
    %541 = vrot.lane.b32.xlu0 %v510, 104
    %v542 = vpop.permute.xlu0 %541
    %543 = vrot.lane.b32.xlu0 %v514, 104
    %v544 = vpop.permute.xlu0 %543
    %545 = vrot.lane.b32.xlu0 %v513, 104
    %v546 = vpop.permute.xlu0 %545
    %v563 = vadd.f32 %v400, %v516
    %v564 = vadd.f32 %v401, %v518
    %v565 = vadd.f32 %v402, %v520
    %v566 = vadd.f32 %v403, %v522
    %v567 = vadd.f32 %v404, %v524
    %v568 = vadd.f32 %v405, %v526
    %v569 = vadd.f32 %v406, %v528
    %v570 = vadd.f32 %v407, %v530
    %v571 = vadd.f32 %v408, %v532
    %v572 = vadd.f32 %v409, %v534
    %v573 = vadd.f32 %v410, %v536
    %v574 = vadd.f32 %v411, %v538
    %v575 = vadd.f32 %v412, %v540
    %v576 = vadd.f32 %v413, %v542
    %v577 = vadd.f32 %v414, %v544
    %v578 = vadd.f32 %v415, %v546
    %vm579 = vcmask 261312
    %v580 = vsel %vm579, %v563, -inf
    %vm581 = vcmask 258240
    %v582 = vsel %vm581, %v564, -inf
    %v583 = vmax.f32 %v580, %v582
    %v584 = vrot.slane %v583, 4
    %v585 = vmax.f32 %v583, %v584
    %v586 = vrot.slane %v585, 2
    %v587 = vmax.f32 %v585, %v586
    %v588 = vrot.slane %v587, 1
    %v589 = vmax.f32 %v587, %v588
    %v590 = vsel %vm579, %v565, -inf
    %v591 = vsel %vm581, %v566, -inf
    %v592 = vmax.f32 %v590, %v591
    %v593 = vrot.slane %v592, 4
    %v594 = vmax.f32 %v592, %v593
    %v595 = vrot.slane %v594, 2
    %v596 = vmax.f32 %v594, %v595
    %v597 = vrot.slane %v596, 1
    %v598 = vmax.f32 %v596, %v597
    %v599 = vsel %vm579, %v567, -inf
    %v600 = vsel %vm581, %v568, -inf
    %v601 = vmax.f32 %v599, %v600
    %v602 = vrot.slane %v601, 4
    %v603 = vmax.f32 %v601, %v602
    %v604 = vrot.slane %v603, 2
    %v605 = vmax.f32 %v603, %v604
    %v606 = vrot.slane %v605, 1
    %v607 = vmax.f32 %v605, %v606
    %v608 = vsel %vm579, %v569, -inf
    %v609 = vsel %vm581, %v570, -inf
    %v610 = vmax.f32 %v608, %v609
    %v611 = vrot.slane %v610, 4
    %v612 = vmax.f32 %v610, %v611
    %v613 = vrot.slane %v612, 2
    %v614 = vmax.f32 %v612, %v613
    %v615 = vrot.slane %v614, 1
    %v616 = vmax.f32 %v614, %v615
    %v617 = vsel %vm579, %v571, -inf
    %v618 = vsel %vm581, %v572, -inf
    %v619 = vmax.f32 %v617, %v618
    %v620 = vrot.slane %v619, 4
    %v621 = vmax.f32 %v619, %v620
    %v622 = vrot.slane %v621, 2
    %v623 = vmax.f32 %v621, %v622
    %v624 = vrot.slane %v623, 1
    %v625 = vmax.f32 %v623, %v624
    %v626 = vsel %vm579, %v573, -inf
    %v627 = vsel %vm581, %v574, -inf
    %v628 = vmax.f32 %v626, %v627
    %v629 = vrot.slane %v628, 4
    %v630 = vmax.f32 %v628, %v629
    %v631 = vrot.slane %v630, 2
    %v632 = vmax.f32 %v630, %v631
    %v633 = vrot.slane %v632, 1
    %v634 = vmax.f32 %v632, %v633
    %v635 = vsel %vm579, %v575, -inf
    %v636 = vsel %vm581, %v576, -inf
    %v637 = vmax.f32 %v635, %v636
    %v638 = vrot.slane %v637, 4
    %v639 = vmax.f32 %v637, %v638
    %v640 = vrot.slane %v639, 2
    %v641 = vmax.f32 %v639, %v640
    %v642 = vrot.slane %v641, 1
    %v643 = vmax.f32 %v641, %v642
    %v644 = vsel %vm579, %v577, -inf
    %v645 = vsel %vm581, %v578, -inf
    %v646 = vmax.f32 %v644, %v645
    %v647 = vrot.slane %v646, 4
    %v648 = vmax.f32 %v646, %v647
    %v649 = vrot.slane %v648, 2
    %v650 = vmax.f32 %v648, %v649
    %v651 = vrot.slane %v650, 1
    %v652 = vmax.f32 %v650, %v651
    %vm653 = vcmask 1043456
    %v654 = vrot.slane %v160, 4
    %v655 = vrot.slane %v163, 4
    %v656 = vsel %vm653, %v654, %v655
    %v657 = vrot.slane %v168, 4
    %v658 = vrot.slane %v171, 4
    %v659 = vsel %vm653, %v657, %v658
    %v660 = vrot.slane %v176, 4
    %v661 = vrot.slane %v179, 4
    %v662 = vsel %vm653, %v660, %v661
    %v663 = vrot.slane %v184, 4
    %v664 = vrot.slane %v187, 4
    %v665 = vsel %vm653, %v663, %v664
    %v666 = vrot.slane %v192, 4
    %v667 = vrot.slane %v195, 4
    %v668 = vsel %vm653, %v666, %v667
    %v669 = vrot.slane %v200, 4
    %v670 = vrot.slane %v203, 4
    %v671 = vsel %vm653, %v669, %v670
    %v672 = vrot.slane %v208, 4
    %v673 = vrot.slane %v211, 4
    %v674 = vsel %vm653, %v672, %v673
    %v675 = vrot.slane %v216, 4
    %v676 = vrot.slane %v219, 4
    %v677 = vsel %vm653, %v675, %v676
    %678 = vrot.lane.b32.xlu0 %v656, 96
    %v679 = vpop.permute.xlu0 %678
    %680 = vrot.lane.b32.xlu0 %v655, 96
    %v681 = vpop.permute.xlu0 %680
    %682 = vrot.lane.b32.xlu0 %v659, 96
    %v683 = vpop.permute.xlu0 %682
    %684 = vrot.lane.b32.xlu0 %v658, 96
    %v685 = vpop.permute.xlu0 %684
    %686 = vrot.lane.b32.xlu0 %v662, 96
    %v687 = vpop.permute.xlu0 %686
    %688 = vrot.lane.b32.xlu0 %v661, 96
    %v689 = vpop.permute.xlu0 %688
    %690 = vrot.lane.b32.xlu0 %v665, 96
    %v691 = vpop.permute.xlu0 %690
    %692 = vrot.lane.b32.xlu0 %v664, 96
    %v693 = vpop.permute.xlu0 %692
    %694 = vrot.lane.b32.xlu0 %v668, 96
    %v695 = vpop.permute.xlu0 %694
    %696 = vrot.lane.b32.xlu0 %v667, 96
    %v697 = vpop.permute.xlu0 %696
    %698 = vrot.lane.b32.xlu0 %v671, 96
    %v699 = vpop.permute.xlu0 %698
    %700 = vrot.lane.b32.xlu0 %v670, 96
    %v701 = vpop.permute.xlu0 %700
    %702 = vrot.lane.b32.xlu0 %v674, 96
    %v703 = vpop.permute.xlu0 %702
    %704 = vrot.lane.b32.xlu0 %v673, 96
    %v705 = vpop.permute.xlu0 %704
    %706 = vrot.lane.b32.xlu0 %v677, 96
    %v707 = vpop.permute.xlu0 %706
    %708 = vrot.lane.b32.xlu0 %v676, 96
    %v709 = vpop.permute.xlu0 %708
    %v726 = vadd.f32 %v563, %v679
    %v727 = vadd.f32 %v564, %v681
    %v728 = vadd.f32 %v565, %v683
    %v729 = vadd.f32 %v566, %v685
    %v730 = vadd.f32 %v567, %v687
    %v731 = vadd.f32 %v568, %v689
    %v732 = vadd.f32 %v569, %v691
    %v733 = vadd.f32 %v570, %v693
    %v734 = vadd.f32 %v571, %v695
    %v735 = vadd.f32 %v572, %v697
    %v736 = vadd.f32 %v573, %v699
    %v737 = vadd.f32 %v574, %v701
    %v738 = vadd.f32 %v575, %v703
    %v739 = vadd.f32 %v576, %v705
    %v740 = vadd.f32 %v577, %v707
    %v741 = vadd.f32 %v578, %v709
    %vm742 = vcmask 523712
    %v743 = vsel %vm742, %v726, -inf
    %vm744 = vcmask 519616
    %v745 = vsel %vm744, %v727, -inf
    %v746 = vmax.f32 %v743, %v745
    %v747 = vrot.slane %v746, 4
    %v748 = vmax.f32 %v746, %v747
    %v749 = vrot.slane %v748, 2
    %v750 = vmax.f32 %v748, %v749
    %v751 = vrot.slane %v750, 1
    %v752 = vmax.f32 %v750, %v751
    %v753 = vsel %vm742, %v728, -inf
    %v754 = vsel %vm744, %v729, -inf
    %v755 = vmax.f32 %v753, %v754
    %v756 = vrot.slane %v755, 4
    %v757 = vmax.f32 %v755, %v756
    %v758 = vrot.slane %v757, 2
    %v759 = vmax.f32 %v757, %v758
    %v760 = vrot.slane %v759, 1
    %v761 = vmax.f32 %v759, %v760
    %v762 = vsel %vm742, %v730, -inf
    %v763 = vsel %vm744, %v731, -inf
    %v764 = vmax.f32 %v762, %v763
    %v765 = vrot.slane %v764, 4
    %v766 = vmax.f32 %v764, %v765
    %v767 = vrot.slane %v766, 2
    %v768 = vmax.f32 %v766, %v767
    %v769 = vrot.slane %v768, 1
    %v770 = vmax.f32 %v768, %v769
    %v771 = vsel %vm742, %v732, -inf
    %v772 = vsel %vm744, %v733, -inf
    %v773 = vmax.f32 %v771, %v772
    %v774 = vrot.slane %v773, 4
    %v775 = vmax.f32 %v773, %v774
    %v776 = vrot.slane %v775, 2
    %v777 = vmax.f32 %v775, %v776
    %v778 = vrot.slane %v777, 1
    %v779 = vmax.f32 %v777, %v778
    %v780 = vsel %vm742, %v734, -inf
    %v781 = vsel %vm744, %v735, -inf
    %v782 = vmax.f32 %v780, %v781
    %v783 = vrot.slane %v782, 4
    %v784 = vmax.f32 %v782, %v783
    %v785 = vrot.slane %v784, 2
    %v786 = vmax.f32 %v784, %v785
    %v787 = vrot.slane %v786, 1
    %v788 = vmax.f32 %v786, %v787
    %v789 = vsel %vm742, %v736, -inf
    %v790 = vsel %vm744, %v737, -inf
    %v791 = vmax.f32 %v789, %v790
    %v792 = vrot.slane %v791, 4
    %v793 = vmax.f32 %v791, %v792
    %v794 = vrot.slane %v793, 2
    %v795 = vmax.f32 %v793, %v794
    %v796 = vrot.slane %v795, 1
    %v797 = vmax.f32 %v795, %v796
    %v798 = vsel %vm742, %v738, -inf
    %v799 = vsel %vm744, %v739, -inf
    %v800 = vmax.f32 %v798, %v799
    %v801 = vrot.slane %v800, 4
    %v802 = vmax.f32 %v800, %v801
    %v803 = vrot.slane %v802, 2
    %v804 = vmax.f32 %v802, %v803
    %v805 = vrot.slane %v804, 1
    %v806 = vmax.f32 %v804, %v805
    %v807 = vsel %vm742, %v740, -inf
    %v808 = vsel %vm744, %v741, -inf
    %v809 = vmax.f32 %v807, %v808
    %v810 = vrot.slane %v809, 4
    %v811 = vmax.f32 %v809, %v810
    %v812 = vrot.slane %v811, 2
    %v813 = vmax.f32 %v811, %v812
    %v814 = vrot.slane %v813, 1
    %v815 = vmax.f32 %v813, %v814
    %vm824 = vcmask 1041409
    %v825 = vsel %vm824, %v435, %v426
    %vm826 = vcmask 1042434
    %v827 = vsel %vm826, %v444, %v825
    %vm828 = vcmask 1043459
    %v829 = vsel %vm828, %v453, %v827
    %vm830 = vcmask 1044484
    %v831 = vsel %vm830, %v462, %v829
    %vm832 = vcmask 1045509
    %v833 = vsel %vm832, %v471, %v831
    %vm834 = vcmask 1046534
    %v835 = vsel %vm834, %v480, %v833
    %vm836 = vcmask 1047559
    %v837 = vsel %vm836, %v489, %v835
    %v847 = vsel %vm824, %v598, %v589
    %v848 = vsel %vm826, %v607, %v847
    %v849 = vsel %vm828, %v616, %v848
    %v850 = vsel %vm830, %v625, %v849
    %v851 = vsel %vm832, %v634, %v850
    %v852 = vsel %vm834, %v643, %v851
    %v853 = vsel %vm836, %v652, %v852
    %854 = vrot.lane.b32.xlu0 %v853, 112
    %v855 = vpop.permute.xlu0 %854
    %v865 = vsel %vm824, %v761, %v752
    %v866 = vsel %vm826, %v770, %v865
    %v867 = vsel %vm828, %v779, %v866
    %v868 = vsel %vm830, %v788, %v867
    %v869 = vsel %vm832, %v797, %v868
    %v870 = vsel %vm834, %v806, %v869
    %v871 = vsel %vm836, %v815, %v870
    %872 = vrot.lane.b32.xlu0 %v871, 88
    %v873 = vpop.permute.xlu0 %872
    %v875 = vsel %vm416, %v837, %v855
    %vm876 = vcmask 130048
    %v877 = vsel %vm876, %v875, %v873
    %v878 = vld [vmem:[%s2] sm:$0x1]
    %v880 = vlaneseq
    %v881 = vshrl.u32 %v880, 7
    %v882 = vsub.s32 0, %v881
    %v883 = vrot.slane %v878, %v882
    %v885 = vadd.f32 %v877, %v883
    %v886 = vmax.f32 %v885, 0.0
    %v887 = vpack.c.bf16 %v886, %v886
    %v888 = vld [vmem:[%s3] sm:$0xf]
    %v889 = vld [vmem:[%s3 + $0x4] sm:$0xf]
    %v890 = vld [vmem:[%s3 + $0x8] sm:$0xf]
    %v891 = vld [vmem:[%s5] sm:$0x1]
    %v893 = vlaneseq
    %v894 = vshrl.u32 %v893, 7
    %v895 = vsub.s32 0, %v894
    %v896 = vrot.slane %v891, %v895
    %v901 = vunpack.c.l.b16 %v888
    %v902 = vunpack.c.l.b16 %v889
    %v903 = vunpack.c.l.b16 %v890
    %v904 = vpack.c.b16 %v902, %v901
    %v905 = vpack.c.b16 %v903, %v903
    %vm907 = vcmask 195584
    %v909 = vsel %vm907, %v887, 0
    %v912 = vsel %vm653, %v905, 0
    %914 = vmatprep.subr.bf16.mxu0 0
    %915 = vmatpush1.bf16.msra.mxu0 %v904
    %916 = vmatprep.subr.bf16.mxu0 0
    %917 = vmatpush1.bf16.msra.mxu0 %v912
    %918 = vmatprep.subr.bf16.mxu0 0
    %919 = vmatpush1.bf16.msra.mxu0 0
    %920 = vmatprep.subr.bf16.mxu0 0
    %921 = vmatpush1.bf16.msra.mxu0 0
    %922 = vmatprep.subr.bf16.mxu0 0
    %923 = vmatpush1.bf16.msra.mxu0 0
    %924 = vmatprep.subr.bf16.mxu0 0
    %925 = vmatpush1.bf16.msra.mxu0 0
    %926 = vmatprep.subr.bf16.mxu0 0
    %927 = vmatpush1.bf16.msra.mxu0 0
    %928 = vmatprep.subr.bf16.mxu0 0
    %929 = vmatpush1.bf16.msra.mxu0 0
    %930 = vmatprep.subr.bf16.mxu0 0
    %931 = vmatpush1.bf16.msra.mxu0 0
    %932 = vmatprep.subr.bf16.mxu0 0
    %933 = vmatpush1.bf16.msra.mxu0 0
    %934 = vmatprep.subr.bf16.mxu0 0
    %935 = vmatpush1.bf16.msra.mxu0 0
    %936 = vmatprep.subr.bf16.mxu0 0
    %937 = vmatpush1.bf16.msra.mxu0 0
    %938 = vmatprep.subr.bf16.mxu0 0
    %939 = vmatpush1.bf16.msra.mxu0 0
    %940 = vmatprep.subr.bf16.mxu0 0
    %941 = vmatpush1.bf16.msra.mxu0 0
    %942 = vmatprep.subr.bf16.mxu0 0
    %943 = vmatpush1.bf16.msra.mxu0 0
    %944 = vmatprep.subr.bf16.mxu0 0
    %945 = vmatpush1.bf16.msra.mxu0 0
    %946 = vmatprep.mubr.bf16.mxu0 0
    %947 = vmatmul.mubr.bf16.gmra.mrb[0].mxu0 %v909
    %v948 = vpop.f32.mrb[0].mxu0
    %v949 = vadd.f32 %v896, %v948
    %v950 = vpop.f32.mrb[0].mxu0
    %v951 = vpop.f32.mrb[0].mxu0
    %v952 = vpop.f32.mrb[0].mxu0
    %953 = vdwg.mxu0
    %v954 = vmax.f32 %v949, 0.0
    %v955 = vpack.c.bf16 %v954, %v954
    %v956 = vld [vmem:[%s4] sm:$0xf]
    %v957 = vld [vmem:[%s4 + $0x4] sm:$0xf]
    %v958 = vld [vmem:[%s4 + $0x8] sm:$0xf]
    %v959 = vld [vmem:[%s4 + $0xc] sm:$0xf]
    %v960 = vld [vmem:[%s6] sm:$0x1]
    %v962 = vlaneseq
    %v963 = vshrl.u32 %v962, 7
    %v964 = vsub.s32 0, %v963
    %v965 = vrot.slane %v960, %v964
    %v971 = vunpack.c.l.b16 %v956
    %v972 = vunpack.c.l.b16 %v957
    %v973 = vunpack.c.l.b16 %v958
    %v974 = vunpack.c.l.b16 %v959
    %v975 = vpack.c.b16 %v972, %v971
    %v976 = vpack.c.b16 %v974, %v973
    %v980 = vsel %vm100, %v955, 0
    %982 = vmatprep.subr.bf16.mxu0 0
    %983 = vmatpush1.bf16.msra.mxu0 %v975
    %984 = vmatprep.subr.bf16.mxu0 0
    %985 = vmatpush1.bf16.msra.mxu0 %v976
    %986 = vmatprep.subr.bf16.mxu0 0
    %987 = vmatpush1.bf16.msra.mxu0 0
    %988 = vmatprep.subr.bf16.mxu0 0
    %989 = vmatpush1.bf16.msra.mxu0 0
    %990 = vmatprep.subr.bf16.mxu0 0
    %991 = vmatpush1.bf16.msra.mxu0 0
    %992 = vmatprep.subr.bf16.mxu0 0
    %993 = vmatpush1.bf16.msra.mxu0 0
    %994 = vmatprep.subr.bf16.mxu0 0
    %995 = vmatpush1.bf16.msra.mxu0 0
    %996 = vmatprep.subr.bf16.mxu0 0
    %997 = vmatpush1.bf16.msra.mxu0 0
    %998 = vmatprep.subr.bf16.mxu0 0
    %999 = vmatpush1.bf16.msra.mxu0 0
    %1000 = vmatprep.subr.bf16.mxu0 0
    %1001 = vmatpush1.bf16.msra.mxu0 0
    %1002 = vmatprep.subr.bf16.mxu0 0
    %1003 = vmatpush1.bf16.msra.mxu0 0
    %1004 = vmatprep.subr.bf16.mxu0 0
    %1005 = vmatpush1.bf16.msra.mxu0 0
    %1006 = vmatprep.subr.bf16.mxu0 0
    %1007 = vmatpush1.bf16.msra.mxu0 0
    %1008 = vmatprep.subr.bf16.mxu0 0
    %1009 = vmatpush1.bf16.msra.mxu0 0
    %1010 = vmatprep.subr.bf16.mxu0 0
    %1011 = vmatpush1.bf16.msra.mxu0 0
    %1012 = vmatprep.subr.bf16.mxu0 0
    %1013 = vmatpush1.bf16.msra.mxu0 0
    %1014 = vmatprep.mubr.bf16.mxu0 0
    %1015 = vmatmul.mubr.bf16.gmra.mrb[0].mxu0 %v980
    %v1016 = vpop.f32.mrb[0].mxu0
    %v1017 = vadd.f32 %v965, %v1016
    %v1018 = vpop.f32.mrb[0].mxu0
    %v1019 = vpop.f32.mrb[0].mxu0
    %v1020 = vpop.f32.mrb[0].mxu0
    %1021 = vdwg.mxu0
    %v1022 = vmax.f32 %v1017, 0.0
    %1023 = vst [vmem:[#allocation2] sm:$0xff] %v1022
    // Predicated region
    $region30: #{tpu_custom_call.1} parent=1 // pred_check
      _
    $region31: #{tpu_custom_call.1} parent=1 // pred_check_branch
      %1025 = sbr.rel (0) target = $region33
    $region32: #{tpu_custom_call.1} parent=1 // pred_region
      %s1027 = ssub.s32 128, 128
      %1028 = vsyncadd [#allocation3], %s1027
      %s1030 = sshll.u32 [#allocation2], 4
      %s1031 = int_to_ptr.vmem [resolvable:$true] %s1030
      %1033 = dma.vmem_to_hbm [thread:$0]  %s1031, 128, %s7, [#allocation3]
    $region33: #{tpu_custom_call.1} parent=1 // pred_fallthru
      _
    // Predicated region
    $region34: #{tpu_custom_call.1} parent=1 // pred_check
      _
    $region35: #{tpu_custom_call.1} parent=1 // pred_check_branch
      %1035 = sbr.rel (0) target = $region37
    $region36: #{tpu_custom_call.1} parent=1 // pred_region
      %1036 = dma.done [#allocation3], 128
    $region37: #{tpu_custom_call.1} parent=1 // pred_fallthru
      _
    %1037 = vsyncpa [#allocation3], 1

</llo_original>
